<compile_context>
chip_gen: v6e
topology: v6e:2x2x1
jax: 0.10.0
libtpu: 0.0.40
codegen_flags: <defaults>
</compile_context>

<pallas_src>
import functools

import jax
import jax.numpy as jnp
from jax.experimental import pallas as pl
from jax.experimental.pallas import tpu as pltpu


def _cubic_attention_kernel(x_ref, wh_ref, ww_ref, prm_ref, o_ref):
    x = x_ref[0].astype(jnp.float32)               # (C, H, W) compute in f32
    C, H, W = x.shape
    k = wh_ref.shape[2] // C                       # taps per channel (=3)

    prm = prm_ref[...]                             # (C, 1, 8) fused per-channel scalars
    aH, bH, cH = prm[:, :, 0:1], prm[:, :, 1:2], prm[:, :, 2:3]
    aW, bW, cW = prm[:, :, 3:4], prm[:, :, 4:5], prm[:, :, 5:6]
    gamma, beta = prm[:, :, 6:7], prm[:, :, 7:8]

    wh = wh_ref[...]                               # (C, 1, k*C): [c, 0, c'*k + t]
    ww = ww_ref[...]

    def channel_filter(w_cols, m):
        # 1x1 conv of the per-channel global mean + tanh, expanded per channel.
        # m: (C, 1, 1).  Unrolled over input channels so the result stays in
        # the (C, 1, k) leading-channel layout (no cross-layout reshape).
        acc = w_cols[:, :, 0:k] * m[0:1]
        for cp in range(1, C):
            acc = acc + w_cols[:, :, cp * k:(cp + 1) * k] * m[cp:cp + 1]
        return jnp.tanh(acc)                       # (C, 1, k)

    # ---------------- H branch: strip attention along W ----------------
    row_mean = jnp.mean(x, axis=2, keepdims=True)              # (C, H, 1)
    m_x = jnp.mean(row_mean, axis=1, keepdims=True)            # (C, 1, 1) global mean
    fH = channel_filter(wh, m_x)                                # (C, 1, 3)
    fh0, fh1, fh2 = fH[:, :, 0:1], fH[:, :, 1:2], fH[:, :, 2:3]

    # Reflect padding along W realized exactly by shifted-slice concat.
    x_left = jnp.concatenate([x[:, :, 1:2], x[:, :, :W - 1]], axis=2)    # x[., w-1]
    x_right = jnp.concatenate([x[:, :, 1:], x[:, :, W - 2:W - 1]], axis=2)  # x[., w+1]

    out_h = x_left * fh0 + x * fh1 + x_right * fh2
    out1 = out_h * aH + row_mean * bH + x * cH

    # ---------------- W branch: strip attention along H ----------------
    col_mean = jnp.mean(out1, axis=1, keepdims=True)            # (C, 1, W)
    m_o1 = jnp.mean(col_mean, axis=2, keepdims=True)            # (C, 1, 1)
    fW = channel_filter(ww, m_o1)                                # (C, 1, 3)
    fw0, fw1, fw2 = fW[:, :, 0:1], fW[:, :, 1:2], fW[:, :, 2:3]

    y_up = jnp.concatenate([out1[:, 1:2, :], out1[:, :H - 1, :]], axis=1)       # out1[h-1, .]
    y_dn = jnp.concatenate([out1[:, 1:, :], out1[:, H - 2:H - 1, :]], axis=1)   # out1[h+1, .]

    out_w = y_up * fw0 + out1 * fw1 + y_dn * fw2
    out2 = out_w * aW + col_mean * bW + out1 * cW

    # ---------------- cubic combine ----------------
    o_ref[0] = (out2 * gamma + x * beta).astype(o_ref.dtype)


@functools.partial(jax.jit, static_argnames=("kernel", "group"))
def cubic_attention_pallas(x, conv_h_w, ia_h, ll_h, lh_h,
                           conv_w_w, ia_w, ll_w, lh_w,
                           gamma, beta, *, kernel=3, group=2):
    """x: (N, C, H, W); conv_*_w: (group*kernel, C); ia_*: (C,1,1); ll/lh: (C,);
    gamma/beta: (C,1,1)."""
    assert kernel == 3, "specialized to the module default kernel=3, dilation=1"
    N, C, H, W = x.shape
    assert H >= 2 and W >= 2
    cg = C // group
    f32 = jnp.float32

    # 1x1-conv weights expanded per output channel, laid out so the kernel can
    # slice (C, 1, k) coefficient blocks per input channel: [c, 0, c'*k + t].
    g_idx = jnp.arange(C) // cg
    t_idx = jnp.arange(kernel)
    def expand_cols(cw):
        cw = cw.reshape(group * kernel, C).astype(f32)
        wexp = cw[g_idx[:, None] * kernel + t_idx[None, :], :]      # (C, k, C): [c, t, c']
        return wexp.transpose(0, 2, 1).reshape(C, 1, C * kernel)    # [c, 0, c'*k + t]
    whcols = expand_cols(conv_h_w)
    wwcols = expand_cols(conv_w_w)

    # Pre-fused per-channel scalars, packed (C, 1, 8) so in-kernel lane slices
    # give (C, 1, 1) broadcast shapes directly.
    ia_h = ia_h.reshape(C).astype(f32); ll_h = ll_h.reshape(C).astype(f32)
    lh_h = lh_h.reshape(C).astype(f32)
    ia_w = ia_w.reshape(C).astype(f32); ll_w = ll_w.reshape(C).astype(f32)
    lh_w = lh_w.reshape(C).astype(f32)
    prm = jnp.stack([(ia_h + 1.0) * ll_h, -ia_h * ll_h, lh_h + 1.0,
                     (ia_w + 1.0) * ll_w, -ia_w * ll_w, lh_w + 1.0,
                     gamma.reshape(C).astype(f32),
                     beta.reshape(C).astype(f32)], axis=1).reshape(C, 1, 8)

    const3 = lambda b: (0, 0, 0)
    out = pl.pallas_call(
        _cubic_attention_kernel,
        out_shape=jax.ShapeDtypeStruct((N, C, H, W), x.dtype),
        grid=(N,),
        in_specs=[
            pl.BlockSpec((1, C, H, W), lambda b: (b, 0, 0, 0)),   # x (native dtype)
            pl.BlockSpec((C, 1, kernel * C), const3),             # H-branch conv cols
            pl.BlockSpec((C, 1, kernel * C), const3),             # W-branch conv cols
            pl.BlockSpec((C, 1, 8), const3),                      # fused per-channel scalars
        ],
        out_specs=pl.BlockSpec((1, C, H, W), lambda b: (b, 0, 0, 0)),
        compiler_params=pltpu.CompilerParams(dimension_semantics=("parallel",)),
    )(x, whcols, wwcols, prm)
    return out


# ------------------------- pure-JAX reference -------------------------
def _strip_att_reference(x, conv_w, inside_all, lamb_l, lamb_h, kernel, group, horizontal):
    N, C, H, W = x.shape
    cg = C // group
    mean_x = x.mean(axis=(2, 3))                                   # ap(x) -> (N, C)
    filt = jnp.tanh(mean_x @ conv_w.T).reshape(N, group, kernel)   # (N, g, k)
    f_pc = jnp.repeat(filt, cg, axis=1)                            # (N, C, k)
    if horizontal:
        x_pad = jnp.pad(x, ((0, 0), (0, 0), (0, 0), (1, 1)), mode="reflect")
        taps = jnp.stack([x_pad[..., t:t + W] for t in range(kernel)], axis=-1)
        gap = x.mean(axis=3, keepdims=True)
    else:
        x_pad = jnp.pad(x, ((0, 0), (0, 0), (1, 1), (0, 0)), mode="reflect")
        taps = jnp.stack([x_pad[:, :, t:t + H, :] for t in range(kernel)], axis=-1)
        gap = x.mean(axis=2, keepdims=True)
    out = jnp.sum(taps * f_pc[:, :, None, None, :], axis=-1)
    ia = inside_all.reshape(1, C, 1, 1)
    out_low = (out * (ia + 1.0) - ia * gap) * lamb_l.reshape(1, C, 1, 1)
    out_high = x * (lamb_h.reshape(1, C, 1, 1) + 1.0)
    return out_low + out_high


def cubic_attention_reference(x, conv_h_w, ia_h, ll_h, lh_h,
                              conv_w_w, ia_w, ll_w, lh_w, gamma, beta,
                              kernel=3, group=2):
    C = x.shape[1]
    out = _strip_att_reference(x, conv_h_w, ia_h, ll_h, lh_h, kernel, group, True)
    out = _strip_att_reference(out, conv_w_w, ia_w, ll_w, lh_w, kernel, group, False)
    return gamma.reshape(1, C, 1, 1) * out + x * beta.reshape(1, C, 1, 1)


if __name__ == "__main__":
    key = jax.random.PRNGKey(0)
    ks = jax.random.split(key, 11)

    N, C, H, W = 2, 4, 16, 16
    group, kernel = 2, 3

    x = jax.random.normal(ks[0], (N, C, H, W), dtype=jnp.float32)
    # The module zero-inits conv/inside_all/lamb_*/gamma (forward degenerates to
    # identity); use small deterministic random values so the whole compute path
    # is exercised.
    conv_h_w = 0.1 * jax.random.normal(ks[1], (group * kernel, C), dtype=jnp.float32)
    conv_w_w = 0.1 * jax.random.normal(ks[2], (group * kernel, C), dtype=jnp.float32)
    ia_h = 0.1 * jax.random.normal(ks[3], (C, 1, 1), dtype=jnp.float32)
    ll_h = 0.1 * jax.random.normal(ks[4], (C,), dtype=jnp.float32)
    lh_h = 0.1 * jax.random.normal(ks[5], (C,), dtype=jnp.float32)
    ia_w = 0.1 * jax.random.normal(ks[6], (C, 1, 1), dtype=jnp.float32)
    ll_w = 0.1 * jax.random.normal(ks[7], (C,), dtype=jnp.float32)
    lh_w = 0.1 * jax.random.normal(ks[8], (C,), dtype=jnp.float32)
    gamma = 0.1 * jax.random.normal(ks[9], (C, 1, 1), dtype=jnp.float32)
    beta = 1.0 + 0.1 * jax.random.normal(ks[10], (C, 1, 1), dtype=jnp.float32)

    out = cubic_attention_pallas(x, conv_h_w, ia_h, ll_h, lh_h,
                                 conv_w_w, ia_w, ll_w, lh_w, gamma, beta,
                                 kernel=kernel, group=group)
    out = jax.block_until_ready(out)

    ref = cubic_attention_reference(x, conv_h_w, ia_h, ll_h, lh_h,
                                    conv_w_w, ia_w, ll_w, lh_w, gamma, beta,
                                    kernel=kernel, group=group)
    max_err = float(jnp.max(jnp.abs(out - ref)))
    assert jnp.allclose(out, ref, atol=1e-4, rtol=1e-4), f"max abs err {max_err}"
    print("KERNEL_OK")
</pallas_src>

<mosaic_0001>
module attributes {stable_mosaic.version = 11 : i64} {
  func.func @_cubic_attention_kernel(%arg0: i32, %arg1: memref<1x4x16x16xf32, #tpu.memory_space<vmem>>, %arg2: memref<4x1x12xf32, #tpu.memory_space<vmem>>, %arg3: memref<4x1x12xf32, #tpu.memory_space<vmem>>, %arg4: memref<4x1x8xf32, #tpu.memory_space<vmem>>, %arg5: memref<1x4x16x16xf32, #tpu.memory_space<vmem>>) attributes {dimension_semantics = [#tpu.dimension_semantics<parallel>], iteration_bounds = array<i64: 2>, scalar_prefetch = 0 : i64, scratch_operands = 0 : i64, tpu.core_type = #tpu.core_type<tc>, window_params = [{transform_indices = @transform_0, window_bounds = array<i64: 1, 4, 16, 16>}, {pipeline_mode = #tpu.pipeline_mode<synchronous>, transform_indices = @transform_1, window_bounds = array<i64: 4, 1, 12>}, {pipeline_mode = #tpu.pipeline_mode<synchronous>, transform_indices = @transform_2, window_bounds = array<i64: 4, 1, 12>}, {pipeline_mode = #tpu.pipeline_mode<synchronous>, transform_indices = @transform_3, window_bounds = array<i64: 4, 1, 8>}, {transform_indices = @transform_4, window_bounds = array<i64: 1, 4, 16, 16>}]} {
    %c0 = arith.constant 0 : index
    %c0_0 = arith.constant 0 : index
    %c0_1 = arith.constant 0 : index
    %c0_2 = arith.constant 0 : index
    %0 = vector.load %arg1[%c0, %c0_0, %c0_1, %c0_2] : memref<1x4x16x16xf32, #tpu.memory_space<vmem>>, vector<1x4x16x16xf32>
    %1 = vector.shape_cast %0 : vector<1x4x16x16xf32> to vector<4x16x16xf32>
    %c0_3 = arith.constant 0 : index
    %c0_4 = arith.constant 0 : index
    %c0_5 = arith.constant 0 : index
    %2 = vector.load %arg4[%c0_3, %c0_4, %c0_5] : memref<4x1x8xf32, #tpu.memory_space<vmem>>, vector<4x1x8xf32>
    %3 = vector.extract_strided_slice %2 {offsets = [0, 0, 0], sizes = [4, 1, 1], strides = [1, 1, 1]} : vector<4x1x8xf32> to vector<4x1x1xf32>
    %4 = vector.extract_strided_slice %2 {offsets = [0, 0, 1], sizes = [4, 1, 1], strides = [1, 1, 1]} : vector<4x1x8xf32> to vector<4x1x1xf32>
    %5 = vector.extract_strided_slice %2 {offsets = [0, 0, 2], sizes = [4, 1, 1], strides = [1, 1, 1]} : vector<4x1x8xf32> to vector<4x1x1xf32>
    %6 = vector.extract_strided_slice %2 {offsets = [0, 0, 3], sizes = [4, 1, 1], strides = [1, 1, 1]} : vector<4x1x8xf32> to vector<4x1x1xf32>
    %7 = vector.extract_strided_slice %2 {offsets = [0, 0, 4], sizes = [4, 1, 1], strides = [1, 1, 1]} : vector<4x1x8xf32> to vector<4x1x1xf32>
    %8 = vector.extract_strided_slice %2 {offsets = [0, 0, 5], sizes = [4, 1, 1], strides = [1, 1, 1]} : vector<4x1x8xf32> to vector<4x1x1xf32>
    %9 = vector.extract_strided_slice %2 {offsets = [0, 0, 6], sizes = [4, 1, 1], strides = [1, 1, 1]} : vector<4x1x8xf32> to vector<4x1x1xf32>
    %10 = vector.extract_strided_slice %2 {offsets = [0, 0, 7], sizes = [4, 1, 1], strides = [1, 1, 1]} : vector<4x1x8xf32> to vector<4x1x1xf32>
    %c0_6 = arith.constant 0 : index
    %c0_7 = arith.constant 0 : index
    %c0_8 = arith.constant 0 : index
    %11 = vector.load %arg2[%c0_6, %c0_7, %c0_8] : memref<4x1x12xf32, #tpu.memory_space<vmem>>, vector<4x1x12xf32>
    %c0_9 = arith.constant 0 : index
    %c0_10 = arith.constant 0 : index
    %c0_11 = arith.constant 0 : index
    %12 = vector.load %arg3[%c0_9, %c0_10, %c0_11] : memref<4x1x12xf32, #tpu.memory_space<vmem>>, vector<4x1x12xf32>
    %cst = arith.constant dense<0.000000e+00> : vector<4x16xf32>
    %13 = vector.multi_reduction <add>, %1, %cst [2] : vector<4x16x16xf32> to vector<4x16xf32>
    %14 = vector.shape_cast %13 : vector<4x16xf32> to vector<4x16x1xf32>
    %cst_12 = arith.constant 1.600000e+01 : f32
    %15 = vector.broadcast %cst_12 : f32 to vector<4x16x1xf32>
    %16 = arith.divf %14, %15 : vector<4x16x1xf32>
    %cst_13 = arith.constant dense<0.000000e+00> : vector<4x1xf32>
    %17 = vector.multi_reduction <add>, %16, %cst_13 [1] : vector<4x16x1xf32> to vector<4x1xf32>
    %18 = vector.shape_cast %17 : vector<4x1xf32> to vector<4x1x1xf32>
    %cst_14 = arith.constant 1.600000e+01 : f32
    %19 = vector.broadcast %cst_14 : f32 to vector<4x1x1xf32>
    %20 = arith.divf %18, %19 : vector<4x1x1xf32>
    %21 = vector.extract_strided_slice %11 {offsets = [0, 0, 0], sizes = [4, 1, 3], strides = [1, 1, 1]} : vector<4x1x12xf32> to vector<4x1x3xf32>
    %22 = vector.extract_strided_slice %20 {offsets = [0, 0, 0], sizes = [1, 1, 1], strides = [1, 1, 1]} : vector<4x1x1xf32> to vector<1x1x1xf32>
    %23 = vector.broadcast %22 : vector<1x1x1xf32> to vector<4x1x3xf32>
    %24 = arith.mulf %21, %23 : vector<4x1x3xf32>
    %25 = vector.extract_strided_slice %11 {offsets = [0, 0, 3], sizes = [4, 1, 3], strides = [1, 1, 1]} : vector<4x1x12xf32> to vector<4x1x3xf32>
    %26 = vector.extract_strided_slice %20 {offsets = [1, 0, 0], sizes = [1, 1, 1], strides = [1, 1, 1]} : vector<4x1x1xf32> to vector<1x1x1xf32>
    %27 = vector.broadcast %26 : vector<1x1x1xf32> to vector<4x1x3xf32>
    %28 = arith.mulf %25, %27 : vector<4x1x3xf32>
    %29 = arith.addf %24, %28 : vector<4x1x3xf32>
    %30 = vector.extract_strided_slice %11 {offsets = [0, 0, 6], sizes = [4, 1, 3], strides = [1, 1, 1]} : vector<4x1x12xf32> to vector<4x1x3xf32>
    %31 = vector.extract_strided_slice %20 {offsets = [2, 0, 0], sizes = [1, 1, 1], strides = [1, 1, 1]} : vector<4x1x1xf32> to vector<1x1x1xf32>
    %32 = vector.broadcast %31 : vector<1x1x1xf32> to vector<4x1x3xf32>
    %33 = arith.mulf %30, %32 : vector<4x1x3xf32>
    %34 = arith.addf %29, %33 : vector<4x1x3xf32>
    %35 = vector.extract_strided_slice %11 {offsets = [0, 0, 9], sizes = [4, 1, 3], strides = [1, 1, 1]} : vector<4x1x12xf32> to vector<4x1x3xf32>
    %36 = vector.extract_strided_slice %20 {offsets = [3, 0, 0], sizes = [1, 1, 1], strides = [1, 1, 1]} : vector<4x1x1xf32> to vector<1x1x1xf32>
    %37 = vector.broadcast %36 : vector<1x1x1xf32> to vector<4x1x3xf32>
    %38 = arith.mulf %35, %37 : vector<4x1x3xf32>
    %39 = arith.addf %34, %38 : vector<4x1x3xf32>
    %40 = math.tanh %39 : vector<4x1x3xf32>
    %41 = vector.extract_strided_slice %40 {offsets = [0, 0, 0], sizes = [4, 1, 1], strides = [1, 1, 1]} : vector<4x1x3xf32> to vector<4x1x1xf32>
    %42 = vector.extract_strided_slice %40 {offsets = [0, 0, 1], sizes = [4, 1, 1], strides = [1, 1, 1]} : vector<4x1x3xf32> to vector<4x1x1xf32>
    %43 = vector.extract_strided_slice %40 {offsets = [0, 0, 2], sizes = [4, 1, 1], strides = [1, 1, 1]} : vector<4x1x3xf32> to vector<4x1x1xf32>
    %44 = vector.extract_strided_slice %1 {offsets = [0, 0, 1], sizes = [4, 16, 1], strides = [1, 1, 1]} : vector<4x16x16xf32> to vector<4x16x1xf32>
    %45 = vector.extract_strided_slice %1 {offsets = [0, 0, 0], sizes = [4, 16, 15], strides = [1, 1, 1]} : vector<4x16x16xf32> to vector<4x16x15xf32>
    %46 = tpu.concatenate %44, %45 in 2 : vector<4x16x1xf32>, vector<4x16x15xf32> -> vector<4x16x16xf32>
    %47 = vector.extract_strided_slice %1 {offsets = [0, 0, 1], sizes = [4, 16, 15], strides = [1, 1, 1]} : vector<4x16x16xf32> to vector<4x16x15xf32>
    %48 = vector.extract_strided_slice %1 {offsets = [0, 0, 14], sizes = [4, 16, 1], strides = [1, 1, 1]} : vector<4x16x16xf32> to vector<4x16x1xf32>
    %49 = tpu.concatenate %47, %48 in 2 : vector<4x16x15xf32>, vector<4x16x1xf32> -> vector<4x16x16xf32>
    %50 = vector.broadcast %41 : vector<4x1x1xf32> to vector<4x16x16xf32>
    %51 = arith.mulf %46, %50 : vector<4x16x16xf32>
    %52 = vector.broadcast %42 : vector<4x1x1xf32> to vector<4x16x16xf32>
    %53 = arith.mulf %1, %52 : vector<4x16x16xf32>
    %54 = arith.addf %51, %53 : vector<4x16x16xf32>
    %55 = vector.broadcast %43 : vector<4x1x1xf32> to vector<4x16x16xf32>
    %56 = arith.mulf %49, %55 : vector<4x16x16xf32>
    %57 = arith.addf %54, %56 : vector<4x16x16xf32>
    %58 = vector.broadcast %3 : vector<4x1x1xf32> to vector<4x16x16xf32>
    %59 = arith.mulf %57, %58 : vector<4x16x16xf32>
    %60 = vector.broadcast %4 : vector<4x1x1xf32> to vector<4x16x1xf32>
    %61 = arith.mulf %16, %60 : vector<4x16x1xf32>
    %62 = vector.broadcast %61 : vector<4x16x1xf32> to vector<4x16x16xf32>
    %63 = arith.addf %59, %62 : vector<4x16x16xf32>
    %64 = vector.broadcast %5 : vector<4x1x1xf32> to vector<4x16x16xf32>
    %65 = arith.mulf %1, %64 : vector<4x16x16xf32>
    %66 = arith.addf %63, %65 : vector<4x16x16xf32>
    %cst_15 = arith.constant dense<0.000000e+00> : vector<4x16xf32>
    %67 = vector.multi_reduction <add>, %66, %cst_15 [1] : vector<4x16x16xf32> to vector<4x16xf32>
    %68 = vector.shape_cast %67 : vector<4x16xf32> to vector<4x1x16xf32>
    %cst_16 = arith.constant 1.600000e+01 : f32
    %69 = vector.broadcast %cst_16 : f32 to vector<4x1x16xf32>
    %70 = arith.divf %68, %69 : vector<4x1x16xf32>
    %cst_17 = arith.constant dense<0.000000e+00> : vector<4x1xf32>
    %71 = vector.multi_reduction <add>, %70, %cst_17 [2] : vector<4x1x16xf32> to vector<4x1xf32>
    %72 = vector.shape_cast %71 : vector<4x1xf32> to vector<4x1x1xf32>
    %cst_18 = arith.constant 1.600000e+01 : f32
    %73 = vector.broadcast %cst_18 : f32 to vector<4x1x1xf32>
    %74 = arith.divf %72, %73 : vector<4x1x1xf32>
    %75 = vector.extract_strided_slice %12 {offsets = [0, 0, 0], sizes = [4, 1, 3], strides = [1, 1, 1]} : vector<4x1x12xf32> to vector<4x1x3xf32>
    %76 = vector.extract_strided_slice %74 {offsets = [0, 0, 0], sizes = [1, 1, 1], strides = [1, 1, 1]} : vector<4x1x1xf32> to vector<1x1x1xf32>
    %77 = vector.broadcast %76 : vector<1x1x1xf32> to vector<4x1x3xf32>
    %78 = arith.mulf %75, %77 : vector<4x1x3xf32>
    %79 = vector.extract_strided_slice %12 {offsets = [0, 0, 3], sizes = [4, 1, 3], strides = [1, 1, 1]} : vector<4x1x12xf32> to vector<4x1x3xf32>
    %80 = vector.extract_strided_slice %74 {offsets = [1, 0, 0], sizes = [1, 1, 1], strides = [1, 1, 1]} : vector<4x1x1xf32> to vector<1x1x1xf32>
    %81 = vector.broadcast %80 : vector<1x1x1xf32> to vector<4x1x3xf32>
    %82 = arith.mulf %79, %81 : vector<4x1x3xf32>
    %83 = arith.addf %78, %82 : vector<4x1x3xf32>
    %84 = vector.extract_strided_slice %12 {offsets = [0, 0, 6], sizes = [4, 1, 3], strides = [1, 1, 1]} : vector<4x1x12xf32> to vector<4x1x3xf32>
    %85 = vector.extract_strided_slice %74 {offsets = [2, 0, 0], sizes = [1, 1, 1], strides = [1, 1, 1]} : vector<4x1x1xf32> to vector<1x1x1xf32>
    %86 = vector.broadcast %85 : vector<1x1x1xf32> to vector<4x1x3xf32>
    %87 = arith.mulf %84, %86 : vector<4x1x3xf32>
    %88 = arith.addf %83, %87 : vector<4x1x3xf32>
    %89 = vector.extract_strided_slice %12 {offsets = [0, 0, 9], sizes = [4, 1, 3], strides = [1, 1, 1]} : vector<4x1x12xf32> to vector<4x1x3xf32>
    %90 = vector.extract_strided_slice %74 {offsets = [3, 0, 0], sizes = [1, 1, 1], strides = [1, 1, 1]} : vector<4x1x1xf32> to vector<1x1x1xf32>
    %91 = vector.broadcast %90 : vector<1x1x1xf32> to vector<4x1x3xf32>
    %92 = arith.mulf %89, %91 : vector<4x1x3xf32>
    %93 = arith.addf %88, %92 : vector<4x1x3xf32>
    %94 = math.tanh %93 : vector<4x1x3xf32>
    %95 = vector.extract_strided_slice %94 {offsets = [0, 0, 0], sizes = [4, 1, 1], strides = [1, 1, 1]} : vector<4x1x3xf32> to vector<4x1x1xf32>
    %96 = vector.extract_strided_slice %94 {offsets = [0, 0, 1], sizes = [4, 1, 1], strides = [1, 1, 1]} : vector<4x1x3xf32> to vector<4x1x1xf32>
    %97 = vector.extract_strided_slice %94 {offsets = [0, 0, 2], sizes = [4, 1, 1], strides = [1, 1, 1]} : vector<4x1x3xf32> to vector<4x1x1xf32>
    %98 = vector.extract_strided_slice %66 {offsets = [0, 1, 0], sizes = [4, 1, 16], strides = [1, 1, 1]} : vector<4x16x16xf32> to vector<4x1x16xf32>
    %99 = vector.extract_strided_slice %66 {offsets = [0, 0, 0], sizes = [4, 15, 16], strides = [1, 1, 1]} : vector<4x16x16xf32> to vector<4x15x16xf32>
    %100 = tpu.concatenate %98, %99 in 1 : vector<4x1x16xf32>, vector<4x15x16xf32> -> vector<4x16x16xf32>
    %101 = vector.extract_strided_slice %66 {offsets = [0, 1, 0], sizes = [4, 15, 16], strides = [1, 1, 1]} : vector<4x16x16xf32> to vector<4x15x16xf32>
    %102 = vector.extract_strided_slice %66 {offsets = [0, 14, 0], sizes = [4, 1, 16], strides = [1, 1, 1]} : vector<4x16x16xf32> to vector<4x1x16xf32>
    %103 = tpu.concatenate %101, %102 in 1 : vector<4x15x16xf32>, vector<4x1x16xf32> -> vector<4x16x16xf32>
    %104 = vector.broadcast %95 : vector<4x1x1xf32> to vector<4x16x16xf32>
    %105 = arith.mulf %100, %104 : vector<4x16x16xf32>
    %106 = vector.broadcast %96 : vector<4x1x1xf32> to vector<4x16x16xf32>
    %107 = arith.mulf %66, %106 : vector<4x16x16xf32>
    %108 = arith.addf %105, %107 : vector<4x16x16xf32>
    %109 = vector.broadcast %97 : vector<4x1x1xf32> to vector<4x16x16xf32>
    %110 = arith.mulf %103, %109 : vector<4x16x16xf32>
    %111 = arith.addf %108, %110 : vector<4x16x16xf32>
    %112 = vector.broadcast %6 : vector<4x1x1xf32> to vector<4x16x16xf32>
    %113 = arith.mulf %111, %112 : vector<4x16x16xf32>
    %114 = vector.broadcast %7 : vector<4x1x1xf32> to vector<4x1x16xf32>
    %115 = arith.mulf %70, %114 : vector<4x1x16xf32>
    %116 = vector.broadcast %115 : vector<4x1x16xf32> to vector<4x16x16xf32>
    %117 = arith.addf %113, %116 : vector<4x16x16xf32>
    %118 = vector.broadcast %8 : vector<4x1x1xf32> to vector<4x16x16xf32>
    %119 = arith.mulf %66, %118 : vector<4x16x16xf32>
    %120 = arith.addf %117, %119 : vector<4x16x16xf32>
    %121 = vector.broadcast %9 : vector<4x1x1xf32> to vector<4x16x16xf32>
    %122 = arith.mulf %120, %121 : vector<4x16x16xf32>
    %123 = vector.broadcast %10 : vector<4x1x1xf32> to vector<4x16x16xf32>
    %124 = arith.mulf %1, %123 : vector<4x16x16xf32>
    %125 = arith.addf %122, %124 : vector<4x16x16xf32>
    %c0_19 = arith.constant 0 : index
    %c0_20 = arith.constant 0 : index
    %c0_21 = arith.constant 0 : index
    %c0_22 = arith.constant 0 : index
    %126 = vector.load %arg5[%c0_19, %c0_20, %c0_21, %c0_22] : memref<1x4x16x16xf32, #tpu.memory_space<vmem>>, vector<1x4x16x16xf32>
    %127 = vector.shape_cast %126 : vector<1x4x16x16xf32> to vector<4x16x16xf32>
    %128 = vector.shape_cast %125 : vector<4x16x16xf32> to vector<1x4x16x16xf32>
    tpu.vector_store %arg5[%c0_19, %c0_20, %c0_21, %c0_22], %128 {strides = array<i32>} : memref<1x4x16x16xf32, #tpu.memory_space<vmem>>, vector<1x4x16x16xf32>,
    return
  }
  func.func @transform_0(%arg0: i32) -> (i32, i32, i32, i32) {
    %c0_i32 = arith.constant 0 : i32
    %c0_i32_0 = arith.constant 0 : i32
    %c0_i32_1 = arith.constant 0 : i32
    %c0_i32_2 = arith.constant 0 : i32
    return %arg0, %c0_i32, %c0_i32_0, %c0_i32_1 : i32, i32, i32, i32
  }
  func.func @transform_1(%arg0: i32) -> (i32, i32, i32) {
    %c0_i32 = arith.constant 0 : i32
    %c0_i32_0 = arith.constant 0 : i32
    %c0_i32_1 = arith.constant 0 : i32
    %c0_i32_2 = arith.constant 0 : i32
    return %c0_i32, %c0_i32_0, %c0_i32_1 : i32, i32, i32
  }
  func.func @transform_2(%arg0: i32) -> (i32, i32, i32) {
    %c0_i32 = arith.constant 0 : i32
    %c0_i32_0 = arith.constant 0 : i32
    %c0_i32_1 = arith.constant 0 : i32
    %c0_i32_2 = arith.constant 0 : i32
    return %c0_i32, %c0_i32_0, %c0_i32_1 : i32, i32, i32
  }
  func.func @transform_3(%arg0: i32) -> (i32, i32, i32) {
    %c0_i32 = arith.constant 0 : i32
    %c0_i32_0 = arith.constant 0 : i32
    %c0_i32_1 = arith.constant 0 : i32
    %c0_i32_2 = arith.constant 0 : i32
    return %c0_i32, %c0_i32_0, %c0_i32_1 : i32, i32, i32
  }
  func.func @transform_4(%arg0: i32) -> (i32, i32, i32, i32) {
    %c0_i32 = arith.constant 0 : i32
    %c0_i32_0 = arith.constant 0 : i32
    %c0_i32_1 = arith.constant 0 : i32
    %c0_i32_2 = arith.constant 0 : i32
    return %arg0, %c0_i32, %c0_i32_0, %c0_i32_1 : i32, i32, i32, i32
  }
}

</mosaic_0001>

<llo_original>
// kernel: cubic_attention_pallas.1
$region0: #{cubic_attention_pallas.1}
  #allocation0 [shape = 'u32[]', space=smem, size = 0x4, offset = 0x4, fixed_abs, tag = 'smem constant byte address 0x4 - core index']
  #allocation1 [shape = 'u32[144,128]{1,0:T(1,128)}', space=vmem, size = 0x12000, scoped, tag = 'internal scratch']
  %s0 = inlined_call_operand.vmem [shape: f32[2,4,16,16], index: 0, kind: input, shape index: {}]
  %s1 = inlined_call_operand.vmem [shape: f32[4,1,12], index: 1, kind: input, shape index: {}]
  %s2 = inlined_call_operand.vmem [shape: f32[4,1,12], index: 2, kind: input, shape index: {}]
  %s3 = inlined_call_operand.vmem [shape: f32[4,1,8], index: 3, kind: input, shape index: {}]
  %s4 = inlined_call_operand.hbm [shape: f32[2,4,16,16], index: 4, kind: output, shape index: {}]
  %s5 = sld [smem:[#allocation0]]
  $region49: #{cubic_attention_pallas.1} parent=0
    _
  %s7 = ssub.s32 1, %s5
  %s8 = scalar_select 0, %s7, %s5
  $region1: #{cubic_attention_pallas.1} parent=0
    #allocation2 [shape = 'u8[65536]{0}', space=vmem, size = 0x10000, scoped, tag = 'output window, operand 0']
    #allocation3 [shape = 's32[2]{0}', space=sflag, size = 0x8, scoped, tag = 'scoped memory for cubic_attention_pallas.1']
    %9 = vsyncpa [#allocation3], 0
    %s10 = scalar_lea.sflag [#allocation3], 1
    %11 = vsyncpa %s10, 0
    loop: start=0, step=1, limit=4
    $region2: #{cubic_attention_pallas.1} parent=1 // loop_pre_header
      _
    $region3: #{cubic_attention_pallas.1} parent=1 // loop_header
      %s13 = sphi 0, %s17
      %p14 = scmp.ge.s32.totalorder %s13, 4
      %s23 = sphi 0, %s25
      %s26 = sphi 0, %s23
      %s27 = sphi 0, %s26
      %s43 = sphi 0, %s27
      %s47 = sphi 0, %s47
      %s49 = sphi 0, %s47
      %s50 = sphi 0, %s49
      %s64 = sphi 0, %s50
      %s68 = sphi 0, %s68
      %s70 = sphi 0, %s68
      %s71 = sphi 0, %s70
      %s85 = sphi 0, %s71
      %s89 = sphi 0, %s89
      %s91 = sphi 0, %s89
      %s92 = sphi 0, %s91
      %s106 = sphi 0, %s92
      %s112 = sphi 0, %s114
      %s115 = sphi 0, %s112
      %s116 = sphi 0, %s115
      %s132 = sphi 0, %s116
    $region4: #{cubic_attention_pallas.1} parent=1 // loop_header_branch
      %16 = sbr.rel (%p14) target = $region8
    $region5: #{cubic_attention_pallas.1} parent=1 // loop_body
      %s18 = ssub.s32 %s13, 1
      %s19 = ssub.s32 %s13, 2
      %s20 = sadd.s32 %s13, 1
      %s21 = ssub.s32 %s13, %s20
      %p22 = scmp.eq.s32.totalorder %s21, 0
      %s24 = sadd.s32 %s23, 1
      %s25 = scalar_select %p22, %s23, %s24
      %p28 = pneg %p22
      %p29 = scmp.eq.s32.totalorder %s13, 1
      %p30 = por %p28, %p29
      %p31 = scmp.ne.s32.totalorder %s23, %s26
      %p32 = scmp.eq.s32.totalorder %s13, 0
      %p33 = por %p31, %p32
      %p34 = scmp.ne.s32.totalorder %s23, %s26
      %p35 = scmp.eq.s32.totalorder %s18, 1
      %p36 = por %p34, %p35
      %p37 = scmp.ne.s32.totalorder %s26, %s27
      %p38 = scmp.eq.s32.totalorder %s18, 0
      %p39 = por %p37, %p38
      %p40 = scmp.ne.s32.totalorder %s26, %s27
      %p41 = scmp.eq.s32.totalorder %s19, 1
      %p42 = por %p40, %p41
      %p44 = scmp.ne.s32.totalorder %s27, %s43
      %p45 = scmp.eq.s32.totalorder %s19, 0
      %p46 = por %p44, %p45
      %s48 = sadd.s32 %s47, 1
      %p51 = scmp.eq.s32.totalorder %s13, 1
      %p52 = scmp.ne.s32.totalorder %s47, %s49
      %p53 = scmp.eq.s32.totalorder %s13, 0
      %p54 = por %p52, %p53
      %p55 = scmp.ne.s32.totalorder %s47, %s49
      %p56 = scmp.eq.s32.totalorder %s18, 1
      %p57 = por %p55, %p56
      %p58 = scmp.ne.s32.totalorder %s49, %s50
      %p59 = scmp.eq.s32.totalorder %s18, 0
      %p60 = por %p58, %p59
      %p61 = scmp.ne.s32.totalorder %s49, %s50
      %p62 = scmp.eq.s32.totalorder %s19, 1
      %p63 = por %p61, %p62
      %p65 = scmp.ne.s32.totalorder %s50, %s64
      %p66 = scmp.eq.s32.totalorder %s19, 0
      %p67 = por %p65, %p66
      %s69 = sadd.s32 %s68, 1
      %p72 = scmp.eq.s32.totalorder %s13, 1
      %p73 = scmp.ne.s32.totalorder %s68, %s70
      %p74 = scmp.eq.s32.totalorder %s13, 0
      %p75 = por %p73, %p74
      %p76 = scmp.ne.s32.totalorder %s68, %s70
      %p77 = scmp.eq.s32.totalorder %s18, 1
      %p78 = por %p76, %p77
      %p79 = scmp.ne.s32.totalorder %s70, %s71
      %p80 = scmp.eq.s32.totalorder %s18, 0
      %p81 = por %p79, %p80
      %p82 = scmp.ne.s32.totalorder %s70, %s71
      %p83 = scmp.eq.s32.totalorder %s19, 1
      %p84 = por %p82, %p83
      %p86 = scmp.ne.s32.totalorder %s71, %s85
      %p87 = scmp.eq.s32.totalorder %s19, 0
      %p88 = por %p86, %p87
      %s90 = sadd.s32 %s89, 1
      %p93 = scmp.eq.s32.totalorder %s13, 1
      %p94 = scmp.ne.s32.totalorder %s89, %s91
      %p95 = scmp.eq.s32.totalorder %s13, 0
      %p96 = por %p94, %p95
      %p97 = scmp.ne.s32.totalorder %s89, %s91
      %p98 = scmp.eq.s32.totalorder %s18, 1
      %p99 = por %p97, %p98
      %p100 = scmp.ne.s32.totalorder %s91, %s92
      %p101 = scmp.eq.s32.totalorder %s18, 0
      %p102 = por %p100, %p101
      %p103 = scmp.ne.s32.totalorder %s91, %s92
      %p104 = scmp.eq.s32.totalorder %s19, 1
      %p105 = por %p103, %p104
      %p107 = scmp.ne.s32.totalorder %s92, %s106
      %p108 = scmp.eq.s32.totalorder %s19, 0
      %p109 = por %p107, %p108
      %s110 = ssub.s32 %s13, %s20
      %p111 = scmp.eq.s32.totalorder %s110, 0
      %s113 = sadd.s32 %s112, 1
      %s114 = scalar_select %p111, %s112, %s113
      %p117 = pneg %p111
      %p118 = scmp.eq.s32.totalorder %s13, 1
      %p119 = por %p117, %p118
      %p120 = scmp.ne.s32.totalorder %s112, %s115
      %p121 = scmp.eq.s32.totalorder %s13, 0
      %p122 = por %p120, %p121
      %p123 = scmp.ne.s32.totalorder %s112, %s115
      %p124 = scmp.eq.s32.totalorder %s18, 1
      %p125 = por %p123, %p124
      %p126 = scmp.ne.s32.totalorder %s115, %s116
      %p127 = scmp.eq.s32.totalorder %s18, 0
      %p128 = por %p126, %p127
      %p129 = scmp.ne.s32.totalorder %s115, %s116
      %p130 = scmp.eq.s32.totalorder %s19, 1
      %p131 = por %p129, %p130
      %p133 = scmp.ne.s32.totalorder %s116, %s132
      %p134 = scmp.eq.s32.totalorder %s19, 0
      %p135 = por %p133, %p134
      %p136 = scmp.le.s32.totalorder 1, %s13
      %p137 = scmp.lt.s32.totalorder %s13, 3
      %p138 = pnand %p136, %p137
      %p139 = pneg %p138
      // Predicated region
      $region9: #{cubic_attention_pallas.1} parent=5 // pred_check
        _
      $region10: #{cubic_attention_pallas.1} parent=5 // pred_check_branch
        %141 = sbr.rel (%p138) target = $region12
      $region11: #{cubic_attention_pallas.1} parent=5 // pred_region
        %s142 = ssub.s32 %s13, 1
        // Predicated region
        $region13: #{cubic_attention_pallas.1} parent=11 // pred_check
          %p143 = pneg %p60
        $region14: #{cubic_attention_pallas.1} parent=11 // pred_check_branch
          %145 = sbr.rel (%p143) target = $region16
        $region15: #{cubic_attention_pallas.1} parent=11 // pred_region
          _
        $region16: #{cubic_attention_pallas.1} parent=11 // pred_fallthru
          _
        // Predicated region
        $region17: #{cubic_attention_pallas.1} parent=11 // pred_check
          %p146 = pneg %p81
        $region18: #{cubic_attention_pallas.1} parent=11 // pred_check_branch
          %148 = sbr.rel (%p146) target = $region20
        $region19: #{cubic_attention_pallas.1} parent=11 // pred_region
          _
        $region20: #{cubic_attention_pallas.1} parent=11 // pred_fallthru
          _
        // Predicated region
        $region21: #{cubic_attention_pallas.1} parent=11 // pred_check
          %p149 = pneg %p102
        $region22: #{cubic_attention_pallas.1} parent=11 // pred_check_branch
          %151 = sbr.rel (%p149) target = $region24
        $region23: #{cubic_attention_pallas.1} parent=11 // pred_region
          _
        $region24: #{cubic_attention_pallas.1} parent=11 // pred_fallthru
          _
      $region12: #{cubic_attention_pallas.1} parent=5 // pred_fallthru
        _
      %p152 = scmp.lt.s32.totalorder %s13, 2
      // Predicated region
      $region25: #{cubic_attention_pallas.1} parent=5 // pred_check
        %p153 = pneg %p152
      $region26: #{cubic_attention_pallas.1} parent=5 // pred_check_branch
        %155 = sbr.rel (%p153) target = $region28
      $region27: #{cubic_attention_pallas.1} parent=5 // pred_region
        // Predicated region
        $region29: #{cubic_attention_pallas.1} parent=27 // pred_check
          %p156 = pneg %p33
        $region30: #{cubic_attention_pallas.1} parent=27 // pred_check_branch
          %158 = sbr.rel (%p156) target = $region32
        $region31: #{cubic_attention_pallas.1} parent=27 // pred_region
          %p159 = scmp.lt.s32.totalorder %s13, 1
          %s160 = scalar_select %p159, %s13, 1
          %s161 = smul.addr %s160, 8
          %s162 = smul.addr %s161, 8
          %s163 = scalar_lea.vmem %s0, %s162
        $region32: #{cubic_attention_pallas.1} parent=27 // pred_fallthru
          _
      $region28: #{cubic_attention_pallas.1} parent=5 // pred_fallthru
        _
      %p164 = scmp.le.s32.totalorder 1, %s13
      %p165 = scmp.lt.s32.totalorder %s13, 3
      %p166 = pnand %p164, %p165
      %p167 = pneg %p166
      // Predicated region
      $region33: #{cubic_attention_pallas.1} parent=5 // pred_check
        _
      $region34: #{cubic_attention_pallas.1} parent=5 // pred_check_branch
        %169 = sbr.rel (%p166) target = $region36
      $region35: #{cubic_attention_pallas.1} parent=5 // pred_region
        %s170 = ssub.s32 %s13, 1
        %p171 = scmp.lt.s32.totalorder %s18, 1
        %s172 = scalar_select %p171, %s18, 1
        %s173 = smul.addr %s172, 8
        %s174 = smul.addr %s173, 8
        %s175 = scalar_lea.vmem %s0, %s174
        %p176 = pneg %p39
        %p177 = pneg %p36
        %p178 = pneg %p60
        %p179 = pneg %p57
        %p180 = pneg %p81
        %p181 = pneg %p78
        %p182 = pneg %p102
        %p183 = pneg %p99
        %p184 = pneg %p128
        %p185 = pneg %p125
        %s186 = sand.u32 %s115, 1
        %s187 = scalar_lea.sflag [#allocation3], %s186
        %s188 = sand.u32 %s115, 1
        %s189 = smul.addr %s188, 64
        %s190 = scalar_lea.vmem [#allocation2], %s189
        %p191 = scmp.lt.s32.totalorder %s18, 1
        %s192 = scalar_select %p191, %s18, 1
        %s193 = smul.addr %s192, 8
        %s194 = smul.addr %s193, 8
        %s195 = scalar_lea.vmem %s0, %s194
        %v196 = vld [vmem:[%s195] sm:$0xff]
        %v197 = vld [vmem:[%s195 + $0x8] sm:$0xff]
        %v198 = vld [vmem:[%s195 + $0x10] sm:$0xff]
        %v199 = vld [vmem:[%s195 + $0x18] sm:$0xff]
        %v200 = vld [vmem:[%s195 + $0x20] sm:$0xff]
        %v201 = vld [vmem:[%s195 + $0x28] sm:$0xff]
        %v202 = vld [vmem:[%s195 + $0x30] sm:$0xff]
        %v203 = vld [vmem:[%s195 + $0x38] sm:$0xff]
        %v204 = vld [vmem:[%s3] sm:$0x1]
        %v205 = vld [vmem:[%s3 + $0x1] sm:$0x1]
        %v206 = vld [vmem:[%s3 + $0x2] sm:$0x1]
        %v207 = vld [vmem:[%s3 + $0x3] sm:$0x1]
        %v208 = vld [vmem:[%s1] sm:$0x1]
        %v209 = vld [vmem:[%s1 + $0x1] sm:$0x1]
        %v210 = vld [vmem:[%s1 + $0x2] sm:$0x1]
        %v211 = vld [vmem:[%s1 + $0x3] sm:$0x1]
        %v212 = vld [vmem:[%s2] sm:$0x1]
        %v213 = vld [vmem:[%s2 + $0x1] sm:$0x1]
        %v214 = vld [vmem:[%s2 + $0x2] sm:$0x1]
        %v215 = vld [vmem:[%s2 + $0x3] sm:$0x1]
        %vm216 = vcmask 130048
        %v217 = vsel %vm216, %v196, 0.0
        %218 = vadd.xlane.f32.xlu0 %v217
        %v219 = vpop.xlane.xlu0 %218
        %v220 = vsel %vm216, %v197, 0.0
        %221 = vadd.xlane.f32.xlu0 %v220
        %v222 = vpop.xlane.xlu0 %221
        %v223 = vsel %vm216, %v198, 0.0
        %224 = vadd.xlane.f32.xlu0 %v223
        %v225 = vpop.xlane.xlu0 %224
        %v226 = vsel %vm216, %v199, 0.0
        %227 = vadd.xlane.f32.xlu0 %v226
        %v228 = vpop.xlane.xlu0 %227
        %v229 = vsel %vm216, %v200, 0.0
        %230 = vadd.xlane.f32.xlu0 %v229
        %v231 = vpop.xlane.xlu0 %230
        %v232 = vsel %vm216, %v201, 0.0
        %233 = vadd.xlane.f32.xlu0 %v232
        %v234 = vpop.xlane.xlu0 %233
        %v235 = vsel %vm216, %v202, 0.0
        %236 = vadd.xlane.f32.xlu0 %v235
        %v237 = vpop.xlane.xlu0 %236
        %v238 = vsel %vm216, %v203, 0.0
        %239 = vadd.xlane.f32.xlu0 %v238
        %v240 = vpop.xlane.xlu0 %239
        %v241 = vrcp.pop 16.0
        %v242 = vmul.f32 %v219, %v241
        %v243 = vmul.f32 %v222, %v241
        %v244 = vmul.f32 %v225, %v241
        %v245 = vmul.f32 %v228, %v241
        %v246 = vmul.f32 %v231, %v241
        %v247 = vmul.f32 %v234, %v241
        %v248 = vmul.f32 %v237, %v241
        %v249 = vmul.f32 %v240, %v241
        %v250 = vadd.f32 %v242, %v243
        %v251 = vrot.slane %v250, 4
        %v252 = vadd.f32 %v250, %v251
        %v253 = vrot.slane %v252, 2
        %v254 = vadd.f32 %v252, %v253
        %v255 = vrot.slane %v254, 1
        %v256 = vadd.f32 %v254, %v255
        %v257 = vadd.f32 %v244, %v245
        %v258 = vrot.slane %v257, 4
        %v259 = vadd.f32 %v257, %v258
        %v260 = vrot.slane %v259, 2
        %v261 = vadd.f32 %v259, %v260
        %v262 = vrot.slane %v261, 1
        %v263 = vadd.f32 %v261, %v262
        %v264 = vadd.f32 %v246, %v247
        %v265 = vrot.slane %v264, 4
        %v266 = vadd.f32 %v264, %v265
        %v267 = vrot.slane %v266, 2
        %v268 = vadd.f32 %v266, %v267
        %v269 = vrot.slane %v268, 1
        %v270 = vadd.f32 %v268, %v269
        %v271 = vadd.f32 %v248, %v249
        %v272 = vrot.slane %v271, 4
        %v273 = vadd.f32 %v271, %v272
        %v274 = vrot.slane %v273, 2
        %v275 = vadd.f32 %v273, %v274
        %v276 = vrot.slane %v275, 1
        %v277 = vadd.f32 %v275, %v276
        %v278 = vmul.f32 %v256, %v241
        %v279 = vmul.f32 %v263, %v241
        %v280 = vmul.f32 %v270, %v241
        %v281 = vmul.f32 %v277, %v241
        %v282 = vmul.f32 %v208, %v278
        %v283 = vmul.f32 %v209, %v278
        %v284 = vmul.f32 %v210, %v278
        %v285 = vmul.f32 %v211, %v278
        %v286 = vmul.f32 %v208, %v279
        %v287 = vmul.f32 %v209, %v279
        %v288 = vmul.f32 %v210, %v279
        %v289 = vmul.f32 %v211, %v279
        %294 = vrot.lane.b32.xlu0 %v286, 125
        %v295 = vpop.permute.xlu0 %294
        %296 = vrot.lane.b32.xlu0 %v287, 125
        %v297 = vpop.permute.xlu0 %296
        %298 = vrot.lane.b32.xlu0 %v288, 125
        %v299 = vpop.permute.xlu0 %298
        %300 = vrot.lane.b32.xlu0 %v289, 125
        %v301 = vpop.permute.xlu0 %300
        %v306 = vadd.f32 %v282, %v295
        %v307 = vadd.f32 %v283, %v297
        %v308 = vadd.f32 %v284, %v299
        %v309 = vadd.f32 %v285, %v301
        %v310 = vmul.f32 %v208, %v280
        %v311 = vmul.f32 %v209, %v280
        %v312 = vmul.f32 %v210, %v280
        %v313 = vmul.f32 %v211, %v280
        %318 = vrot.lane.b32.xlu0 %v310, 122
        %v319 = vpop.permute.xlu0 %318
        %320 = vrot.lane.b32.xlu0 %v311, 122
        %v321 = vpop.permute.xlu0 %320
        %322 = vrot.lane.b32.xlu0 %v312, 122
        %v323 = vpop.permute.xlu0 %322
        %324 = vrot.lane.b32.xlu0 %v313, 122
        %v325 = vpop.permute.xlu0 %324
        %v330 = vadd.f32 %v306, %v319
        %v331 = vadd.f32 %v307, %v321
        %v332 = vadd.f32 %v308, %v323
        %v333 = vadd.f32 %v309, %v325
        %v334 = vmul.f32 %v208, %v281
        %v335 = vmul.f32 %v209, %v281
        %v336 = vmul.f32 %v210, %v281
        %v337 = vmul.f32 %v211, %v281
        %342 = vrot.lane.b32.xlu0 %v334, 119
        %v343 = vpop.permute.xlu0 %342
        %344 = vrot.lane.b32.xlu0 %v335, 119
        %v345 = vpop.permute.xlu0 %344
        %346 = vrot.lane.b32.xlu0 %v336, 119
        %v347 = vpop.permute.xlu0 %346
        %348 = vrot.lane.b32.xlu0 %v337, 119
        %v349 = vpop.permute.xlu0 %348
        %v354 = vadd.f32 %v330, %v343
        %v355 = vadd.f32 %v331, %v345
        %v356 = vadd.f32 %v332, %v347
        %v357 = vadd.f32 %v333, %v349
        %v358 = vtanh.pop %v354
        %v359 = vtanh.pop %v355
        %v360 = vtanh.pop %v356
        %v361 = vtanh.pop %v357
        %370 = vrot.lane.b32.xlu0 %v196, 127
        %v371 = vpop.permute.xlu0 %370
        %372 = vrot.lane.b32.xlu0 %v197, 127
        %v373 = vpop.permute.xlu0 %372
        %374 = vrot.lane.b32.xlu0 %v198, 127
        %v375 = vpop.permute.xlu0 %374
        %376 = vrot.lane.b32.xlu0 %v199, 127
        %v377 = vpop.permute.xlu0 %376
        %378 = vrot.lane.b32.xlu0 %v200, 127
        %v379 = vpop.permute.xlu0 %378
        %380 = vrot.lane.b32.xlu0 %v201, 127
        %v381 = vpop.permute.xlu0 %380
        %382 = vrot.lane.b32.xlu0 %v202, 127
        %v383 = vpop.permute.xlu0 %382
        %384 = vrot.lane.b32.xlu0 %v203, 127
        %v385 = vpop.permute.xlu0 %384
        %394 = vrot.lane.b32.xlu0 %v196, 1
        %v395 = vpop.permute.xlu0 %394
        %396 = vrot.lane.b32.xlu0 %v197, 1
        %v397 = vpop.permute.xlu0 %396
        %398 = vrot.lane.b32.xlu0 %v198, 1
        %v399 = vpop.permute.xlu0 %398
        %400 = vrot.lane.b32.xlu0 %v199, 1
        %v401 = vpop.permute.xlu0 %400
        %402 = vrot.lane.b32.xlu0 %v200, 1
        %v403 = vpop.permute.xlu0 %402
        %404 = vrot.lane.b32.xlu0 %v201, 1
        %v405 = vpop.permute.xlu0 %404
        %406 = vrot.lane.b32.xlu0 %v202, 1
        %v407 = vpop.permute.xlu0 %406
        %408 = vrot.lane.b32.xlu0 %v203, 1
        %v409 = vpop.permute.xlu0 %408
        %vm418 = vcmask 7168
        %v419 = vsel %vm418, %v371, %v395
        %v420 = vsel %vm418, %v373, %v397
        %v421 = vsel %vm418, %v375, %v399
        %v422 = vsel %vm418, %v377, %v401
        %v423 = vsel %vm418, %v379, %v403
        %v424 = vsel %vm418, %v381, %v405
        %v425 = vsel %vm418, %v383, %v407
        %v426 = vsel %vm418, %v385, %v409
        %vm427 = vcmask 121856
        %v428 = vsel %vm427, %v371, %v395
        %v429 = vsel %vm427, %v373, %v397
        %v430 = vsel %vm427, %v375, %v399
        %v431 = vsel %vm427, %v377, %v401
        %v432 = vsel %vm427, %v379, %v403
        %v433 = vsel %vm427, %v381, %v405
        %v434 = vsel %vm427, %v383, %v407
        %v435 = vsel %vm427, %v385, %v409
        %v440 = vlaneseq
        %v441 = vshrl.u32 %v440, 7
        %v442 = vsub.s32 0, %v441
        %v443 = vrot.slane %v358, %v442
        %v444 = vlaneseq
        %v445 = vshrl.u32 %v444, 7
        %v446 = vsub.s32 0, %v445
        %v447 = vrot.slane %v359, %v446
        %v448 = vlaneseq
        %v449 = vshrl.u32 %v448, 7
        %v450 = vsub.s32 0, %v449
        %v451 = vrot.slane %v360, %v450
        %v452 = vlaneseq
        %v453 = vshrl.u32 %v452, 7
        %v454 = vsub.s32 0, %v453
        %v455 = vrot.slane %v361, %v454
        %456 = vset.pattern.permute.xlu0 0
        %457 = vperm.xlu0 %456, %v443
        %v458 = vpop.permute.xlu0 %457
        %460 = vset.pattern.permute.xlu0 0
        %461 = vperm.xlu0 %460, %v447
        %v462 = vpop.permute.xlu0 %461
        %464 = vset.pattern.permute.xlu0 0
        %465 = vperm.xlu0 %464, %v451
        %v466 = vpop.permute.xlu0 %465
        %468 = vset.pattern.permute.xlu0 0
        %469 = vperm.xlu0 %468, %v455
        %v470 = vpop.permute.xlu0 %469
        %v472 = vmul.f32 %v419, %v458
        %v473 = vmul.f32 %v420, %v458
        %v474 = vmul.f32 %v421, %v462
        %v475 = vmul.f32 %v422, %v462
        %v476 = vmul.f32 %v423, %v466
        %v477 = vmul.f32 %v424, %v466
        %v478 = vmul.f32 %v425, %v470
        %v479 = vmul.f32 %v426, %v470
        %480 = vset.pattern.permute.xlu0 1
        %481 = vperm.xlu0 %480, %v443
        %v482 = vpop.permute.xlu0 %481
        %484 = vset.pattern.permute.xlu0 1
        %485 = vperm.xlu0 %484, %v447
        %v486 = vpop.permute.xlu0 %485
        %488 = vset.pattern.permute.xlu0 1
        %489 = vperm.xlu0 %488, %v451
        %v490 = vpop.permute.xlu0 %489
        %492 = vset.pattern.permute.xlu0 1
        %493 = vperm.xlu0 %492, %v455
        %v494 = vpop.permute.xlu0 %493
        %v496 = vmul.f32 %v196, %v482
        %v497 = vmul.f32 %v197, %v482
        %v498 = vmul.f32 %v198, %v486
        %v499 = vmul.f32 %v199, %v486
        %v500 = vmul.f32 %v200, %v490
        %v501 = vmul.f32 %v201, %v490
        %v502 = vmul.f32 %v202, %v494
        %v503 = vmul.f32 %v203, %v494
        %v504 = vadd.f32 %v472, %v496
        %v505 = vadd.f32 %v473, %v497
        %v506 = vadd.f32 %v474, %v498
        %v507 = vadd.f32 %v475, %v499
        %v508 = vadd.f32 %v476, %v500
        %v509 = vadd.f32 %v477, %v501
        %v510 = vadd.f32 %v478, %v502
        %v511 = vadd.f32 %v479, %v503
        %512 = vset.pattern.permute.xlu0 2
        %513 = vperm.xlu0 %512, %v443
        %v514 = vpop.permute.xlu0 %513
        %516 = vset.pattern.permute.xlu0 2
        %517 = vperm.xlu0 %516, %v447
        %v518 = vpop.permute.xlu0 %517
        %520 = vset.pattern.permute.xlu0 2
        %521 = vperm.xlu0 %520, %v451
        %v522 = vpop.permute.xlu0 %521
        %524 = vset.pattern.permute.xlu0 2
        %525 = vperm.xlu0 %524, %v455
        %v526 = vpop.permute.xlu0 %525
        %v528 = vmul.f32 %v428, %v514
        %v529 = vmul.f32 %v429, %v514
        %v530 = vmul.f32 %v430, %v518
        %v531 = vmul.f32 %v431, %v518
        %v532 = vmul.f32 %v432, %v522
        %v533 = vmul.f32 %v433, %v522
        %v534 = vmul.f32 %v434, %v526
        %v535 = vmul.f32 %v435, %v526
        %v536 = vadd.f32 %v504, %v528
        %v537 = vadd.f32 %v505, %v529
        %v538 = vadd.f32 %v506, %v530
        %v539 = vadd.f32 %v507, %v531
        %v540 = vadd.f32 %v508, %v532
        %v541 = vadd.f32 %v509, %v533
        %v542 = vadd.f32 %v510, %v534
        %v543 = vadd.f32 %v511, %v535
        %v548 = vlaneseq
        %v549 = vshrl.u32 %v548, 7
        %v550 = vsub.s32 0, %v549
        %v551 = vrot.slane %v204, %v550
        %v552 = vlaneseq
        %v553 = vshrl.u32 %v552, 7
        %v554 = vsub.s32 0, %v553
        %v555 = vrot.slane %v205, %v554
        %v556 = vlaneseq
        %v557 = vshrl.u32 %v556, 7
        %v558 = vsub.s32 0, %v557
        %v559 = vrot.slane %v206, %v558
        %v560 = vlaneseq
        %v561 = vshrl.u32 %v560, 7
        %v562 = vsub.s32 0, %v561
        %v563 = vrot.slane %v207, %v562
        %564 = vset.pattern.permute.xlu0 0
        %565 = vperm.xlu0 %564, %v551
        %v566 = vpop.permute.xlu0 %565
        %568 = vset.pattern.permute.xlu0 0
        %569 = vperm.xlu0 %568, %v555
        %v570 = vpop.permute.xlu0 %569
        %572 = vset.pattern.permute.xlu0 0
        %573 = vperm.xlu0 %572, %v559
        %v574 = vpop.permute.xlu0 %573
        %576 = vset.pattern.permute.xlu0 0
        %577 = vperm.xlu0 %576, %v563
        %v578 = vpop.permute.xlu0 %577
        %v580 = vmul.f32 %v536, %v566
        %v581 = vmul.f32 %v537, %v566
        %v582 = vmul.f32 %v538, %v570
        %v583 = vmul.f32 %v539, %v570
        %v584 = vmul.f32 %v540, %v574
        %v585 = vmul.f32 %v541, %v574
        %v586 = vmul.f32 %v542, %v578
        %v587 = vmul.f32 %v543, %v578
        %v592 = vmul.f32 %v242, %v551
        %v593 = vmul.f32 %v243, %v551
        %v594 = vmul.f32 %v244, %v555
        %v595 = vmul.f32 %v245, %v555
        %v596 = vmul.f32 %v246, %v559
        %v597 = vmul.f32 %v247, %v559
        %v598 = vmul.f32 %v248, %v563
        %v599 = vmul.f32 %v249, %v563
        %601 = vset.pattern.permute.xlu0 1
        %602 = vperm.xlu0 %601, %v592
        %v603 = vpop.permute.xlu0 %602
        %606 = vset.pattern.permute.xlu0 1
        %607 = vperm.xlu0 %606, %v593
        %v608 = vpop.permute.xlu0 %607
        %611 = vset.pattern.permute.xlu0 1
        %612 = vperm.xlu0 %611, %v594
        %v613 = vpop.permute.xlu0 %612
        %616 = vset.pattern.permute.xlu0 1
        %617 = vperm.xlu0 %616, %v595
        %v618 = vpop.permute.xlu0 %617
        %621 = vset.pattern.permute.xlu0 1
        %622 = vperm.xlu0 %621, %v596
        %v623 = vpop.permute.xlu0 %622
        %626 = vset.pattern.permute.xlu0 1
        %627 = vperm.xlu0 %626, %v597
        %v628 = vpop.permute.xlu0 %627
        %631 = vset.pattern.permute.xlu0 1
        %632 = vperm.xlu0 %631, %v598
        %v633 = vpop.permute.xlu0 %632
        %636 = vset.pattern.permute.xlu0 1
        %637 = vperm.xlu0 %636, %v599
        %v638 = vpop.permute.xlu0 %637
        %v640 = vadd.f32 %v580, %v603
        %v641 = vadd.f32 %v581, %v608
        %v642 = vadd.f32 %v582, %v613
        %v643 = vadd.f32 %v583, %v618
        %v644 = vadd.f32 %v584, %v623
        %v645 = vadd.f32 %v585, %v628
        %v646 = vadd.f32 %v586, %v633
        %v647 = vadd.f32 %v587, %v638
        %648 = vset.pattern.permute.xlu0 2
        %649 = vperm.xlu0 %648, %v551
        %v650 = vpop.permute.xlu0 %649
        %652 = vset.pattern.permute.xlu0 2
        %653 = vperm.xlu0 %652, %v555
        %v654 = vpop.permute.xlu0 %653
        %656 = vset.pattern.permute.xlu0 2
        %657 = vperm.xlu0 %656, %v559
        %v658 = vpop.permute.xlu0 %657
        %660 = vset.pattern.permute.xlu0 2
        %661 = vperm.xlu0 %660, %v563
        %v662 = vpop.permute.xlu0 %661
        %v664 = vmul.f32 %v196, %v650
        %v665 = vmul.f32 %v197, %v650
        %v666 = vmul.f32 %v198, %v654
        %v667 = vmul.f32 %v199, %v654
        %v668 = vmul.f32 %v200, %v658
        %v669 = vmul.f32 %v201, %v658
        %v670 = vmul.f32 %v202, %v662
        %v671 = vmul.f32 %v203, %v662
        %v672 = vadd.f32 %v640, %v664
        %v673 = vadd.f32 %v641, %v665
        %v674 = vadd.f32 %v642, %v666
        %v675 = vadd.f32 %v643, %v667
        %v676 = vadd.f32 %v644, %v668
        %v677 = vadd.f32 %v645, %v669
        %v678 = vadd.f32 %v646, %v670
        %v679 = vadd.f32 %v647, %v671
        %v680 = vsel %vm216, %v672, 0.0
        %v681 = vsel %vm216, %v673, 0.0
        %v682 = vadd.f32 %v680, %v681
        %v683 = vrot.slane %v682, 4
        %v684 = vadd.f32 %v682, %v683
        %v685 = vrot.slane %v684, 2
        %v686 = vadd.f32 %v684, %v685
        %v687 = vrot.slane %v686, 1
        %v688 = vadd.f32 %v686, %v687
        %v689 = vsel %vm216, %v674, 0.0
        %v690 = vsel %vm216, %v675, 0.0
        %v691 = vadd.f32 %v689, %v690
        %v692 = vrot.slane %v691, 4
        %v693 = vadd.f32 %v691, %v692
        %v694 = vrot.slane %v693, 2
        %v695 = vadd.f32 %v693, %v694
        %v696 = vrot.slane %v695, 1
        %v697 = vadd.f32 %v695, %v696
        %v698 = vsel %vm216, %v676, 0.0
        %v699 = vsel %vm216, %v677, 0.0
        %v700 = vadd.f32 %v698, %v699
        %v701 = vrot.slane %v700, 4
        %v702 = vadd.f32 %v700, %v701
        %v703 = vrot.slane %v702, 2
        %v704 = vadd.f32 %v702, %v703
        %v705 = vrot.slane %v704, 1
        %v706 = vadd.f32 %v704, %v705
        %v707 = vsel %vm216, %v678, 0.0
        %v708 = vsel %vm216, %v679, 0.0
        %v709 = vadd.f32 %v707, %v708
        %v710 = vrot.slane %v709, 4
        %v711 = vadd.f32 %v709, %v710
        %v712 = vrot.slane %v711, 2
        %v713 = vadd.f32 %v711, %v712
        %v714 = vrot.slane %v713, 1
        %v715 = vadd.f32 %v713, %v714
        %v716 = vmul.f32 %v688, %v241
        %v717 = vmul.f32 %v697, %v241
        %v718 = vmul.f32 %v706, %v241
        %v719 = vmul.f32 %v715, %v241
        %v720 = vsel %vm216, %v716, 0.0
        %721 = vadd.xlane.f32.xlu0 %v720
        %v722 = vpop.xlane.xlu0 %721
        %v723 = vsel %vm216, %v717, 0.0
        %724 = vadd.xlane.f32.xlu0 %v723
        %v725 = vpop.xlane.xlu0 %724
        %v726 = vsel %vm216, %v718, 0.0
        %727 = vadd.xlane.f32.xlu0 %v726
        %v728 = vpop.xlane.xlu0 %727
        %v729 = vsel %vm216, %v719, 0.0
        %730 = vadd.xlane.f32.xlu0 %v729
        %v731 = vpop.xlane.xlu0 %730
        %v732 = vmul.f32 %v722, %v241
        %v733 = vmul.f32 %v725, %v241
        %v734 = vmul.f32 %v728, %v241
        %v735 = vmul.f32 %v731, %v241
        %v736 = vmul.f32 %v212, %v732
        %v737 = vmul.f32 %v213, %v732
        %v738 = vmul.f32 %v214, %v732
        %v739 = vmul.f32 %v215, %v732
        %v740 = vmul.f32 %v212, %v733
        %v741 = vmul.f32 %v213, %v733
        %v742 = vmul.f32 %v214, %v733
        %v743 = vmul.f32 %v215, %v733
        %748 = vrot.lane.b32.xlu0 %v740, 125
        %v749 = vpop.permute.xlu0 %748
        %750 = vrot.lane.b32.xlu0 %v741, 125
        %v751 = vpop.permute.xlu0 %750
        %752 = vrot.lane.b32.xlu0 %v742, 125
        %v753 = vpop.permute.xlu0 %752
        %754 = vrot.lane.b32.xlu0 %v743, 125
        %v755 = vpop.permute.xlu0 %754
        %v760 = vadd.f32 %v736, %v749
        %v761 = vadd.f32 %v737, %v751
        %v762 = vadd.f32 %v738, %v753
        %v763 = vadd.f32 %v739, %v755
        %v764 = vmul.f32 %v212, %v734
        %v765 = vmul.f32 %v213, %v734
        %v766 = vmul.f32 %v214, %v734
        %v767 = vmul.f32 %v215, %v734
        %772 = vrot.lane.b32.xlu0 %v764, 122
        %v773 = vpop.permute.xlu0 %772
        %774 = vrot.lane.b32.xlu0 %v765, 122
        %v775 = vpop.permute.xlu0 %774
        %776 = vrot.lane.b32.xlu0 %v766, 122
        %v777 = vpop.permute.xlu0 %776
        %778 = vrot.lane.b32.xlu0 %v767, 122
        %v779 = vpop.permute.xlu0 %778
        %v784 = vadd.f32 %v760, %v773
        %v785 = vadd.f32 %v761, %v775
        %v786 = vadd.f32 %v762, %v777
        %v787 = vadd.f32 %v763, %v779
        %v788 = vmul.f32 %v212, %v735
        %v789 = vmul.f32 %v213, %v735
        %v790 = vmul.f32 %v214, %v735
        %v791 = vmul.f32 %v215, %v735
        %796 = vrot.lane.b32.xlu0 %v788, 119
        %v797 = vpop.permute.xlu0 %796
        %798 = vrot.lane.b32.xlu0 %v789, 119
        %v799 = vpop.permute.xlu0 %798
        %800 = vrot.lane.b32.xlu0 %v790, 119
        %v801 = vpop.permute.xlu0 %800
        %802 = vrot.lane.b32.xlu0 %v791, 119
        %v803 = vpop.permute.xlu0 %802
        %v808 = vadd.f32 %v784, %v797
        %v809 = vadd.f32 %v785, %v799
        %v810 = vadd.f32 %v786, %v801
        %v811 = vadd.f32 %v787, %v803
        %v812 = vtanh.pop %v808
        %v813 = vtanh.pop %v809
        %v814 = vtanh.pop %v810
        %v815 = vtanh.pop %v811
        %v820 = vrot.slane %v672, 1
        %v821 = vrot.slane %v674, 1
        %v822 = vrot.slane %v676, 1
        %v823 = vrot.slane %v678, 1
        %vm832 = vcmask 1040384
        %v833 = vrot.slane %v672, 7
        %v834 = vrot.slane %v673, 7
        %v835 = vsel %vm832, %v833, %v834
        %v836 = vrot.slane %v674, 7
        %v837 = vrot.slane %v675, 7
        %v838 = vsel %vm832, %v836, %v837
        %v839 = vrot.slane %v676, 7
        %v840 = vrot.slane %v677, 7
        %v841 = vsel %vm832, %v839, %v840
        %v842 = vrot.slane %v678, 7
        %v843 = vrot.slane %v679, 7
        %v844 = vsel %vm832, %v842, %v843
        %v853 = vsel %vm832, %v820, %v833
        %v854 = vsel %vm832, %v821, %v836
        %v855 = vsel %vm832, %v822, %v839
        %v856 = vsel %vm832, %v823, %v842
        %vm857 = vcmask 1046528
        %v858 = vrot.slane %v673, 1
        %v859 = vsel %vm857, %v820, %v858
        %v860 = vrot.slane %v675, 1
        %v861 = vsel %vm857, %v821, %v860
        %v862 = vrot.slane %v677, 1
        %v863 = vsel %vm857, %v822, %v862
        %v864 = vrot.slane %v679, 1
        %v865 = vsel %vm857, %v823, %v864
        %v878 = vsel %vm857, %v858, %v834
        %v879 = vsel %vm857, %v860, %v837
        %v880 = vsel %vm857, %v862, %v840
        %v881 = vsel %vm857, %v864, %v843
        %v886 = vlaneseq
        %v887 = vshrl.u32 %v886, 7
        %v888 = vsub.s32 0, %v887
        %v889 = vrot.slane %v812, %v888
        %v890 = vlaneseq
        %v891 = vshrl.u32 %v890, 7
        %v892 = vsub.s32 0, %v891
        %v893 = vrot.slane %v813, %v892
        %v894 = vlaneseq
        %v895 = vshrl.u32 %v894, 7
        %v896 = vsub.s32 0, %v895
        %v897 = vrot.slane %v814, %v896
        %v898 = vlaneseq
        %v899 = vshrl.u32 %v898, 7
        %v900 = vsub.s32 0, %v899
        %v901 = vrot.slane %v815, %v900
        %902 = vset.pattern.permute.xlu0 0
        %903 = vperm.xlu0 %902, %v889
        %v904 = vpop.permute.xlu0 %903
        %906 = vset.pattern.permute.xlu0 0
        %907 = vperm.xlu0 %906, %v893
        %v908 = vpop.permute.xlu0 %907
        %910 = vset.pattern.permute.xlu0 0
        %911 = vperm.xlu0 %910, %v897
        %v912 = vpop.permute.xlu0 %911
        %914 = vset.pattern.permute.xlu0 0
        %915 = vperm.xlu0 %914, %v901
        %v916 = vpop.permute.xlu0 %915
        %v918 = vmul.f32 %v853, %v904
        %v919 = vmul.f32 %v835, %v904
        %v920 = vmul.f32 %v854, %v908
        %v921 = vmul.f32 %v838, %v908
        %v922 = vmul.f32 %v855, %v912
        %v923 = vmul.f32 %v841, %v912
        %v924 = vmul.f32 %v856, %v916
        %v925 = vmul.f32 %v844, %v916
        %926 = vset.pattern.permute.xlu0 1
        %927 = vperm.xlu0 %926, %v889
        %v928 = vpop.permute.xlu0 %927
        %930 = vset.pattern.permute.xlu0 1
        %931 = vperm.xlu0 %930, %v893
        %v932 = vpop.permute.xlu0 %931
        %934 = vset.pattern.permute.xlu0 1
        %935 = vperm.xlu0 %934, %v897
        %v936 = vpop.permute.xlu0 %935
        %938 = vset.pattern.permute.xlu0 1
        %939 = vperm.xlu0 %938, %v901
        %v940 = vpop.permute.xlu0 %939
        %v942 = vmul.f32 %v672, %v928
        %v943 = vmul.f32 %v673, %v928
        %v944 = vmul.f32 %v674, %v932
        %v945 = vmul.f32 %v675, %v932
        %v946 = vmul.f32 %v676, %v936
        %v947 = vmul.f32 %v677, %v936
        %v948 = vmul.f32 %v678, %v940
        %v949 = vmul.f32 %v679, %v940
        %v950 = vadd.f32 %v918, %v942
        %v951 = vadd.f32 %v919, %v943
        %v952 = vadd.f32 %v920, %v944
        %v953 = vadd.f32 %v921, %v945
        %v954 = vadd.f32 %v922, %v946
        %v955 = vadd.f32 %v923, %v947
        %v956 = vadd.f32 %v924, %v948
        %v957 = vadd.f32 %v925, %v949
        %958 = vset.pattern.permute.xlu0 2
        %959 = vperm.xlu0 %958, %v889
        %v960 = vpop.permute.xlu0 %959
        %962 = vset.pattern.permute.xlu0 2
        %963 = vperm.xlu0 %962, %v893
        %v964 = vpop.permute.xlu0 %963
        %966 = vset.pattern.permute.xlu0 2
        %967 = vperm.xlu0 %966, %v897
        %v968 = vpop.permute.xlu0 %967
        %970 = vset.pattern.permute.xlu0 2
        %971 = vperm.xlu0 %970, %v901
        %v972 = vpop.permute.xlu0 %971
        %v974 = vmul.f32 %v859, %v960
        %v975 = vmul.f32 %v878, %v960
        %v976 = vmul.f32 %v861, %v964
        %v977 = vmul.f32 %v879, %v964
        %v978 = vmul.f32 %v863, %v968
        %v979 = vmul.f32 %v880, %v968
        %v980 = vmul.f32 %v865, %v972
        %v981 = vmul.f32 %v881, %v972
        %v982 = vadd.f32 %v950, %v974
        %v983 = vadd.f32 %v951, %v975
        %v984 = vadd.f32 %v952, %v976
        %v985 = vadd.f32 %v953, %v977
        %v986 = vadd.f32 %v954, %v978
        %v987 = vadd.f32 %v955, %v979
        %v988 = vadd.f32 %v956, %v980
        %v989 = vadd.f32 %v957, %v981
        %990 = vset.pattern.permute.xlu0 3
        %991 = vperm.xlu0 %990, %v551
        %v992 = vpop.permute.xlu0 %991
        %994 = vset.pattern.permute.xlu0 3
        %995 = vperm.xlu0 %994, %v555
        %v996 = vpop.permute.xlu0 %995
        %998 = vset.pattern.permute.xlu0 3
        %999 = vperm.xlu0 %998, %v559
        %v1000 = vpop.permute.xlu0 %999
        %1002 = vset.pattern.permute.xlu0 3
        %1003 = vperm.xlu0 %1002, %v563
        %v1004 = vpop.permute.xlu0 %1003
        %v1006 = vmul.f32 %v982, %v992
        %v1007 = vmul.f32 %v983, %v992
        %v1008 = vmul.f32 %v984, %v996
        %v1009 = vmul.f32 %v985, %v996
        %v1010 = vmul.f32 %v986, %v1000
        %v1011 = vmul.f32 %v987, %v1000
        %v1012 = vmul.f32 %v988, %v1004
        %v1013 = vmul.f32 %v989, %v1004
        %1014 = vset.pattern.permute.xlu0 4
        %1015 = vperm.xlu0 %1014, %v204
        %v1016 = vpop.permute.xlu0 %1015
        %v1018 = vlaneseq
        %v1019 = vshrl.u32 %v1018, 7
        %v1020 = vsub.s32 0, %v1019
        %v1021 = vrot.slane %v1016, %v1020
        %1022 = vset.pattern.permute.xlu0 4
        %1023 = vperm.xlu0 %1022, %v205
        %v1024 = vpop.permute.xlu0 %1023
        %v1026 = vlaneseq
        %v1027 = vshrl.u32 %v1026, 7
        %v1028 = vsub.s32 0, %v1027
        %v1029 = vrot.slane %v1024, %v1028
        %1030 = vset.pattern.permute.xlu0 4
        %1031 = vperm.xlu0 %1030, %v206
        %v1032 = vpop.permute.xlu0 %1031
        %v1034 = vlaneseq
        %v1035 = vshrl.u32 %v1034, 7
        %v1036 = vsub.s32 0, %v1035
        %v1037 = vrot.slane %v1032, %v1036
        %1038 = vset.pattern.permute.xlu0 4
        %1039 = vperm.xlu0 %1038, %v207
        %v1040 = vpop.permute.xlu0 %1039
        %v1042 = vlaneseq
        %v1043 = vshrl.u32 %v1042, 7
        %v1044 = vsub.s32 0, %v1043
        %v1045 = vrot.slane %v1040, %v1044
        %v1046 = vmul.f32 %v716, %v1021
        %v1047 = vmul.f32 %v717, %v1029
        %v1048 = vmul.f32 %v718, %v1037
        %v1049 = vmul.f32 %v719, %v1045
        %v1050 = vadd.f32 %v1006, %v1046
        %v1051 = vadd.f32 %v1007, %v1046
        %v1052 = vadd.f32 %v1008, %v1047
        %v1053 = vadd.f32 %v1009, %v1047
        %v1054 = vadd.f32 %v1010, %v1048
        %v1055 = vadd.f32 %v1011, %v1048
        %v1056 = vadd.f32 %v1012, %v1049
        %v1057 = vadd.f32 %v1013, %v1049
        %1058 = vset.pattern.permute.xlu0 5
        %1059 = vperm.xlu0 %1058, %v551
        %v1060 = vpop.permute.xlu0 %1059
        %1062 = vset.pattern.permute.xlu0 5
        %1063 = vperm.xlu0 %1062, %v555
        %v1064 = vpop.permute.xlu0 %1063
        %1066 = vset.pattern.permute.xlu0 5
        %1067 = vperm.xlu0 %1066, %v559
        %v1068 = vpop.permute.xlu0 %1067
        %1070 = vset.pattern.permute.xlu0 5
        %1071 = vperm.xlu0 %1070, %v563
        %v1072 = vpop.permute.xlu0 %1071
        %v1074 = vmul.f32 %v672, %v1060
        %v1075 = vmul.f32 %v673, %v1060
        %v1076 = vmul.f32 %v674, %v1064
        %v1077 = vmul.f32 %v675, %v1064
        %v1078 = vmul.f32 %v676, %v1068
        %v1079 = vmul.f32 %v677, %v1068
        %v1080 = vmul.f32 %v678, %v1072
        %v1081 = vmul.f32 %v679, %v1072
        %v1082 = vadd.f32 %v1050, %v1074
        %v1083 = vadd.f32 %v1051, %v1075
        %v1084 = vadd.f32 %v1052, %v1076
        %v1085 = vadd.f32 %v1053, %v1077
        %v1086 = vadd.f32 %v1054, %v1078
        %v1087 = vadd.f32 %v1055, %v1079
        %v1088 = vadd.f32 %v1056, %v1080
        %v1089 = vadd.f32 %v1057, %v1081
        %1090 = vset.pattern.permute.xlu0 6
        %1091 = vperm.xlu0 %1090, %v551
        %v1092 = vpop.permute.xlu0 %1091
        %1094 = vset.pattern.permute.xlu0 6
        %1095 = vperm.xlu0 %1094, %v555
        %v1096 = vpop.permute.xlu0 %1095
        %1098 = vset.pattern.permute.xlu0 6
        %1099 = vperm.xlu0 %1098, %v559
        %v1100 = vpop.permute.xlu0 %1099
        %1102 = vset.pattern.permute.xlu0 6
        %1103 = vperm.xlu0 %1102, %v563
        %v1104 = vpop.permute.xlu0 %1103
        %v1106 = vmul.f32 %v1082, %v1092
        %v1107 = vmul.f32 %v1083, %v1092
        %v1108 = vmul.f32 %v1084, %v1096
        %v1109 = vmul.f32 %v1085, %v1096
        %v1110 = vmul.f32 %v1086, %v1100
        %v1111 = vmul.f32 %v1087, %v1100
        %v1112 = vmul.f32 %v1088, %v1104
        %v1113 = vmul.f32 %v1089, %v1104
        %1114 = vset.pattern.permute.xlu0 7
        %1115 = vperm.xlu0 %1114, %v551
        %v1116 = vpop.permute.xlu0 %1115
        %1118 = vset.pattern.permute.xlu0 7
        %1119 = vperm.xlu0 %1118, %v555
        %v1120 = vpop.permute.xlu0 %1119
        %1122 = vset.pattern.permute.xlu0 7
        %1123 = vperm.xlu0 %1122, %v559
        %v1124 = vpop.permute.xlu0 %1123
        %1126 = vset.pattern.permute.xlu0 7
        %1127 = vperm.xlu0 %1126, %v563
        %v1128 = vpop.permute.xlu0 %1127
        %v1130 = vmul.f32 %v196, %v1116
        %v1131 = vmul.f32 %v197, %v1116
        %v1132 = vmul.f32 %v198, %v1120
        %v1133 = vmul.f32 %v199, %v1120
        %v1134 = vmul.f32 %v200, %v1124
        %v1135 = vmul.f32 %v201, %v1124
        %v1136 = vmul.f32 %v202, %v1128
        %v1137 = vmul.f32 %v203, %v1128
        %v1138 = vadd.f32 %v1106, %v1130
        %v1139 = vadd.f32 %v1107, %v1131
        %v1140 = vadd.f32 %v1108, %v1132
        %v1141 = vadd.f32 %v1109, %v1133
        %v1142 = vadd.f32 %v1110, %v1134
        %v1143 = vadd.f32 %v1111, %v1135
        %v1144 = vadd.f32 %v1112, %v1136
        %v1145 = vadd.f32 %v1113, %v1137
        %1146 = vst.msk [vmem:[%s190] sm:$0xff] %vm216, %v1138
        %1147 = vst.msk [vmem:[%s190 + $0x8] sm:$0xff] %vm216, %v1139
        %1148 = vst.msk [vmem:[%s190 + $0x10] sm:$0xff] %vm216, %v1140
        %1149 = vst.msk [vmem:[%s190 + $0x18] sm:$0xff] %vm216, %v1141
        %1150 = vst.msk [vmem:[%s190 + $0x20] sm:$0xff] %vm216, %v1142
        %1151 = vst.msk [vmem:[%s190 + $0x28] sm:$0xff] %vm216, %v1143
        %1152 = vst.msk [vmem:[%s190 + $0x30] sm:$0xff] %vm216, %v1144
        %1153 = vst.msk [vmem:[%s190 + $0x38] sm:$0xff] %vm216, %v1145
        %s1154 = sand.u32 %s115, 1
        %s1155 = scalar_lea.sflag [#allocation3], %s1154
        %s1156 = sand.u32 %s115, 1
        %s1157 = smul.addr %s1156, 64
        %s1158 = scalar_lea.vmem [#allocation2], %s1157
        // Predicated region
        $region37: #{cubic_attention_pallas.1} parent=35 // pred_check
          %p1159 = pneg %p125
        $region38: #{cubic_attention_pallas.1} parent=35 // pred_check_branch
          %1161 = sbr.rel (%p1159) target = $region40
        $region39: #{cubic_attention_pallas.1} parent=35 // pred_region
          %s1163 = ssub.s32 1024, 1024
          %1164 = vsyncadd %s1155, %s1163
          %s1165 = smul.addr %s18, 8
          %s1166 = smul.addr %s1165, 128
          %s1167 = scalar_lea.hbm %s4, %s1166
          %s1168 = sshll.u32 %s1158, 4
          %s1169 = int_to_ptr.vmem [resolvable:$true] %s1168
          %1174 = dma.vmem_to_hbm [thread:$0]  %s1169, 1024, %s1167, %s1155, 128, 128, 8
        $region40: #{cubic_attention_pallas.1} parent=35 // pred_fallthru
          _
      $region36: #{cubic_attention_pallas.1} parent=5 // pred_fallthru
        _
      %p1175 = scmp.le.s32.totalorder 2, %s13
      // Predicated region
      $region41: #{cubic_attention_pallas.1} parent=5 // pred_check
        %p1176 = pneg %p1175
      $region42: #{cubic_attention_pallas.1} parent=5 // pred_check_branch
        %1178 = sbr.rel (%p1176) target = $region44
      $region43: #{cubic_attention_pallas.1} parent=5 // pred_region
        %s1179 = ssub.s32 %s13, 2
        // Predicated region
        $region45: #{cubic_attention_pallas.1} parent=43 // pred_check
          %p1180 = pneg %p131
        $region46: #{cubic_attention_pallas.1} parent=43 // pred_check_branch
          %1182 = sbr.rel (%p1180) target = $region48
        $region47: #{cubic_attention_pallas.1} parent=43 // pred_region
          %s1183 = sand.u32 %s116, 1
          %s1184 = scalar_lea.sflag [#allocation3], %s1183
          %s1185 = sand.u32 %s116, 1
          %s1186 = smul.addr %s1185, 64
          %s1187 = scalar_lea.vmem [#allocation2], %s1186
          %1188 = dma.done %s1184, 1024
        $region48: #{cubic_attention_pallas.1} parent=43 // pred_fallthru
          _
      $region44: #{cubic_attention_pallas.1} parent=5 // pred_fallthru
        _
    $region6: #{cubic_attention_pallas.1} parent=1 // loop_footer
      %s17 = sadd.s32 1, %s13
    $region7: #{cubic_attention_pallas.1} parent=1 // loop_footer_branch
      %12 = sbr.rel target = $region3
    $region8: #{cubic_attention_pallas.1} parent=1 // loop_exit
      _
    %1189 = vsyncpa [#allocation3], 1
    %s1190 = scalar_lea.sflag [#allocation3], 1
    %1191 = vsyncpa %s1190, 1

</llo_original>
